<compile_context>
chip_gen: v5e
topology: v5e:2x2
jax: 0.10.0
libtpu: 0.0.40
codegen_flags: <defaults>
</compile_context>

<pallas_src>
import numpy as np
import jax
import jax.numpy as jnp
from jax import lax
from jax.experimental import pallas as pl
from jax.experimental.pallas import tpu as pltpu


# ----------------------------------------------------------------------------
# Axis construction (extendAxis / genFlexPoints) -- pure numpy, done once.
# ----------------------------------------------------------------------------
def extend_axis(axis):
    ext_size = len(axis)
    start = axis[0]
    end = axis[-1]
    dist = end - start
    step = dist / (len(axis) - 1)
    left_ext = np.array([axis[0] - step * i for i in range(1, 1 + ext_size // 2)])
    left_ext = np.flip(left_ext)
    right_ext = np.array([axis[-1] + step * i for i in range(1, 1 + ext_size // 2)])
    return np.concatenate([left_ext, axis, right_ext])


def gen_flex_axes(img_h, img_w):
    """Extended 1-D axes (the factored form of genFlexPoints's meshgrid)."""
    x_axis = extend_axis(np.linspace(-1, 1, img_w)).astype(np.float32)
    y_axis = extend_axis(np.linspace(-1, 1, img_h)).astype(np.float32)
    return x_axis, y_axis


# ----------------------------------------------------------------------------
# homography_mat_from_4_pts -- tiny per-batch 8x8 solve, plain JAX glue.
# TODO(synk): no clean Pallas equivalent for a batched tiny 8x8 solve; kept in XLA.
# ----------------------------------------------------------------------------
def homography_mat_from_4_pts(theta):
    theta = theta.reshape(theta.shape[0], 8)
    b = theta.shape[0]
    xp = theta[:, :4][:, :, None]                      # (b, 4, 1)
    yp = theta[:, 4:][:, :, None]                      # (b, 4, 1)
    x = jnp.array([-1.0, -1.0, 1.0, 1.0], jnp.float32)[None, :, None]
    y = jnp.array([-1.0, 1.0, -1.0, 1.0], jnp.float32)[None, :, None]
    x = jnp.broadcast_to(x, (b, 4, 1))
    y = jnp.broadcast_to(y, (b, 4, 1))
    z = jnp.zeros((b, 4, 1), jnp.float32)
    o = jnp.ones((b, 4, 1), jnp.float32)
    A_top = jnp.concatenate([-x, -y, -o, z, z, z, x * xp, y * xp, xp], axis=2)
    A_bot = jnp.concatenate([z, z, z, -x, -y, -o, x * yp, y * yp, yp], axis=2)
    A = jnp.concatenate([A_top, A_bot], axis=1)        # (b, 8, 9)
    h = jnp.linalg.solve(A[:, :, :8], -A[:, :, 8][:, :, None])  # (b, 8, 1)
    H = jnp.concatenate([h[:, :, 0], jnp.ones((b, 1), jnp.float32)], axis=1)  # (b, 9)
    return H


# ----------------------------------------------------------------------------
# Pallas kernel: per-pixel projective transform over one (TILE_H, 2*We) tile.
# ----------------------------------------------------------------------------
def _homography_warp_kernel(h_ref, x_ref, y_ref, o_ref):
    bi = pl.program_id(0)
    base = bi * 9
    h0 = h_ref[base + 0]
    h1 = h_ref[base + 1]
    h2 = h_ref[base + 2]
    h3 = h_ref[base + 3]
    h4 = h_ref[base + 4]
    h5 = h_ref[base + 5]
    h6 = h_ref[base + 6]
    h7 = h_ref[base + 7]
    h8 = h_ref[base + 8]

    X = x_ref[...]            # (1, 2*We): x values duplicated per lane pair
    Y = y_ref[...]            # (TILE_H, 1)
    w2 = X.shape[1]

    # Even lanes carry the Xp channel, odd lanes the Yp channel: select the
    # homography row per lane once (single-row vregs, broadcast by the VPU).
    lane = lax.broadcasted_iota(jnp.int32, (1, w2), 1)
    is_even = (lane % 2) == 0
    ca = jnp.where(is_even, h0, h3)   # (1, 2*We)
    cb = jnp.where(is_even, h1, h4)
    cc = jnp.where(is_even, h2, h5)

    num = X * ca + Y * cb + cc        # (TILE_H, 2*We)
    k = X * h6 + Y * h7 + h8          # (TILE_H, 2*We)

    # One EUP approximate reciprocal instead of VPU divides; two Newton steps
    # keep f32-level accuracy regardless of the hardware approximation.
    r = pl.reciprocal(k, approx=True)
    r = r * (2.0 - k * r)
    r = r * (2.0 - k * r)

    o_ref[0, :, :] = num * r


def _pick_tile_h(he, w2, target_bytes=2 << 20):
    """Largest multiple-of-8 divisor of He with a ~<=2 MiB f32 tile."""
    if he % 8 != 0:
        return he                      # full-extent block is always legal
    candidates = [t for t in range(8, he + 1, 8) if he % t == 0]
    within = [t for t in candidates if t * w2 * 4 <= target_bytes]
    return max(within) if within else min(candidates)


def stitching_homography_grid_gen(theta, x_axis, y_axis):
    """theta: (b, 8) corner points or (b, 9) homography; x_axis: (We,) f32
    extended x axis; y_axis: (He,) f32 extended y axis.

    Returns (b, He, We, 2) f32, matching the PyTorch module's forward
    (channel 0 = grid_Xp, channel 1 = grid_Yp).
    """
    b = theta.shape[0]
    theta = theta.astype(jnp.float32)
    if theta.shape[1] == 9:
        H = theta
    else:
        H = homography_mat_from_4_pts(theta)
    H_flat = H.reshape(-1)                              # (b*9,) -> 1-D SMEM

    x_axis = jnp.asarray(x_axis, jnp.float32)
    y_axis = jnp.asarray(y_axis, jnp.float32)
    He = y_axis.shape[0]
    We = x_axis.shape[0]
    W2 = 2 * We

    x_row = jnp.repeat(x_axis, 2).reshape(1, W2)        # [x0,x0,x1,x1,...]
    y_col = y_axis.reshape(He, 1)

    tile_h = _pick_tile_h(He, W2)
    grid = (b, He // tile_h)

    out = pl.pallas_call(
        _homography_warp_kernel,
        out_shape=jax.ShapeDtypeStruct((b, He, W2), jnp.float32),
        grid_spec=pltpu.PrefetchScalarGridSpec(
            num_scalar_prefetch=0,
            grid=grid,
            in_specs=[
                pl.BlockSpec(memory_space=pltpu.MemorySpace.SMEM),      # H (b*9,)
                pl.BlockSpec((1, W2), lambda i, h: (0, 0)),             # x row
                pl.BlockSpec((tile_h, 1), lambda i, h: (h, 0)),         # y col
            ],
            out_specs=pl.BlockSpec((1, tile_h, W2), lambda i, h: (i, h, 0)),
        ),
        compiler_params=pltpu.CompilerParams(
            dimension_semantics=("parallel", "parallel")),
    )(H_flat, x_row, y_col)

    # Interleaved [Xp, Yp, Xp, Yp, ...] lanes -> (..., We, 2): free row-major view.
    return out.reshape(b, He, We, 2)


# ----------------------------------------------------------------------------
# Reference (pure jnp) for a silent correctness check.
# ----------------------------------------------------------------------------
def _reference(theta, grid_X, grid_Y):
    theta = theta.astype(jnp.float32)
    H = theta if theta.shape[1] == 9 else homography_mat_from_4_pts(theta)
    h = [H[:, i][:, None, None] for i in range(9)]
    X = grid_X[None, :, :]
    Y = grid_Y[None, :, :]
    Xp = X * h[0] + Y * h[1] + h[2]
    Yp = X * h[3] + Y * h[4] + h[5]
    k = X * h[6] + Y * h[7] + h[8]
    return jnp.stack([Xp / k, Yp / k], axis=3)


if __name__ == "__main__":
    # Small shapes: img_h = img_w = 16 -> extended grid 32 x 32, batch = 2.
    img_h, img_w = 16, 16
    batch = 2

    x_axis_np, y_axis_np = gen_flex_axes(img_h, img_w)   # (32,), (32,)
    x_axis = jnp.asarray(x_axis_np)
    y_axis = jnp.asarray(y_axis_np)

    key = jax.random.PRNGKey(0)
    # theta = 4 corner points (x then y), perturbed from the identity corners.
    base = jnp.array([[-1.0, -1.0, 1.0, 1.0, -1.0, 1.0, -1.0, 1.0]],
                     jnp.float32)
    perturb = 0.1 * jax.random.normal(key, (batch, 8), jnp.float32)
    theta = base + perturb                                # (2, 8)

    out = stitching_homography_grid_gen(theta, x_axis, y_axis)
    out = jax.block_until_ready(out)

    grid_X_np, grid_Y_np = np.meshgrid(x_axis_np, y_axis_np)
    ref = _reference(theta,
                     jnp.asarray(grid_X_np, jnp.float32),
                     jnp.asarray(grid_Y_np, jnp.float32))

    assert out.shape == (batch, y_axis.shape[0], x_axis.shape[0], 2)
    np.testing.assert_allclose(np.asarray(out), np.asarray(ref),
                               rtol=1e-5, atol=1e-5)

    print("KERNEL_OK")
</pallas_src>

<mosaic_0001>
module attributes {stable_mosaic.version = 11 : i64} {
  func.func @_homography_warp_kernel(%arg0: i32, %arg1: i32, %arg2: memref<18xf32, #tpu.memory_space<smem>>, %arg3: memref<1x64xf32, #tpu.memory_space<vmem>>, %arg4: memref<32x1xf32, #tpu.memory_space<vmem>>, %arg5: memref<1x32x64xf32, #tpu.memory_space<vmem>>) attributes {dimension_semantics = [#tpu.dimension_semantics<parallel>, #tpu.dimension_semantics<parallel>], iteration_bounds = array<i64: 2, 1>, scalar_prefetch = 0 : i64, scratch_operands = 0 : i64, tpu.core_type = #tpu.core_type<tc>, window_params = [{transform_indices = @transform_0, window_bounds = array<i64: 18>}, {pipeline_mode = #tpu.pipeline_mode<synchronous>, transform_indices = @transform_1, window_bounds = array<i64: 1, 64>}, {transform_indices = @transform_2, window_bounds = array<i64: 32, 1>}, {transform_indices = @transform_3, window_bounds = array<i64: 1, 32, 64>}]} {
    %c9_i32 = arith.constant 9 : i32
    %0 = arith.muli %arg0, %c9_i32 : i32
    %c0_i32 = arith.constant 0 : i32
    %1 = arith.addi %0, %c0_i32 : i32
    %2 = arith.index_cast %1 : i32 to index
    %3 = memref.load %arg2[%2] : memref<18xf32, #tpu.memory_space<smem>>
    %c1_i32 = arith.constant 1 : i32
    %4 = arith.addi %0, %c1_i32 : i32
    %5 = arith.index_cast %4 : i32 to index
    %6 = memref.load %arg2[%5] : memref<18xf32, #tpu.memory_space<smem>>
    %c2_i32 = arith.constant 2 : i32
    %7 = arith.addi %0, %c2_i32 : i32
    %8 = arith.index_cast %7 : i32 to index
    %9 = memref.load %arg2[%8] : memref<18xf32, #tpu.memory_space<smem>>
    %c3_i32 = arith.constant 3 : i32
    %10 = arith.addi %0, %c3_i32 : i32
    %11 = arith.index_cast %10 : i32 to index
    %12 = memref.load %arg2[%11] : memref<18xf32, #tpu.memory_space<smem>>
    %c4_i32 = arith.constant 4 : i32
    %13 = arith.addi %0, %c4_i32 : i32
    %14 = arith.index_cast %13 : i32 to index
    %15 = memref.load %arg2[%14] : memref<18xf32, #tpu.memory_space<smem>>
    %c5_i32 = arith.constant 5 : i32
    %16 = arith.addi %0, %c5_i32 : i32
    %17 = arith.index_cast %16 : i32 to index
    %18 = memref.load %arg2[%17] : memref<18xf32, #tpu.memory_space<smem>>
    %c6_i32 = arith.constant 6 : i32
    %19 = arith.addi %0, %c6_i32 : i32
    %20 = arith.index_cast %19 : i32 to index
    %21 = memref.load %arg2[%20] : memref<18xf32, #tpu.memory_space<smem>>
    %c7_i32 = arith.constant 7 : i32
    %22 = arith.addi %0, %c7_i32 : i32
    %23 = arith.index_cast %22 : i32 to index
    %24 = memref.load %arg2[%23] : memref<18xf32, #tpu.memory_space<smem>>
    %c8_i32 = arith.constant 8 : i32
    %25 = arith.addi %0, %c8_i32 : i32
    %26 = arith.index_cast %25 : i32 to index
    %27 = memref.load %arg2[%26] : memref<18xf32, #tpu.memory_space<smem>>
    %c0 = arith.constant 0 : index
    %c0_0 = arith.constant 0 : index
    %28 = vector.load %arg3[%c0, %c0_0] : memref<1x64xf32, #tpu.memory_space<vmem>>, vector<1x64xf32>
    %c0_1 = arith.constant 0 : index
    %c0_2 = arith.constant 0 : index
    %29 = vector.load %arg4[%c0_1, %c0_2] : memref<32x1xf32, #tpu.memory_space<vmem>>, vector<32x1xf32>
    %30 = tpu.iota {dimensions = array<i32: 1>} : vector<1x64xi32>
    %c2_i32_3 = arith.constant 2 : i32
    %c0_i32_4 = arith.constant 0 : i32
    %31 = arith.cmpi eq, %c2_i32_3, %c0_i32_4 : i32
    %c1_i32_5 = arith.constant 1 : i32
    %32 = arith.select %31, %c1_i32_5, %c2_i32_3 : i32
    %33 = vector.broadcast %32 : i32 to vector<1x64xi32>
    %34 = arith.remsi %30, %33 : vector<1x64xi32>
    %c0_i32_6 = arith.constant 0 : i32
    %35 = vector.broadcast %c0_i32_6 : i32 to vector<1x64xi32>
    %36 = arith.cmpi ne, %34, %35 : vector<1x64xi32>
    %c0_i32_7 = arith.constant 0 : i32
    %37 = vector.broadcast %c0_i32_7 : i32 to vector<1x64xi32>
    %38 = arith.cmpi slt, %34, %37 : vector<1x64xi32>
    %c0_i32_8 = arith.constant 0 : i32
    %39 = arith.cmpi slt, %32, %c0_i32_8 : i32
    %40 = vector.broadcast %39 : i1 to vector<1x64xi1>
    %41 = vector.broadcast %40 : vector<1x64xi1> to vector<1x64xi1>
    %42 = arith.xori %38, %41 : vector<1x64xi1>
    %43 = arith.andi %42, %36 : vector<1x64xi1>
    %44 = vector.broadcast %32 : i32 to vector<1x64xi32>
    %45 = arith.addi %34, %44 : vector<1x64xi32>
    %46 = arith.select %43, %45, %34 : vector<1x64xi1>, vector<1x64xi32>
    %c0_i32_9 = arith.constant 0 : i32
    %47 = vector.broadcast %c0_i32_9 : i32 to vector<1x64xi32>
    %48 = arith.cmpi eq, %46, %47 : vector<1x64xi32>
    %49 = vector.broadcast %3 : f32 to vector<1x64xf32>
    %50 = vector.broadcast %12 : f32 to vector<1x64xf32>
    %51 = arith.select %48, %49, %50 : vector<1x64xi1>, vector<1x64xf32>
    %52 = vector.broadcast %6 : f32 to vector<1x64xf32>
    %53 = vector.broadcast %15 : f32 to vector<1x64xf32>
    %54 = arith.select %48, %52, %53 : vector<1x64xi1>, vector<1x64xf32>
    %55 = vector.broadcast %9 : f32 to vector<1x64xf32>
    %56 = vector.broadcast %18 : f32 to vector<1x64xf32>
    %57 = arith.select %48, %55, %56 : vector<1x64xi1>, vector<1x64xf32>
    %58 = arith.mulf %28, %51 : vector<1x64xf32>
    %59 = vector.broadcast %29 : vector<32x1xf32> to vector<32x64xf32>
    %60 = vector.broadcast %54 : vector<1x64xf32> to vector<32x64xf32>
    %61 = arith.mulf %59, %60 : vector<32x64xf32>
    %62 = vector.broadcast %58 : vector<1x64xf32> to vector<32x64xf32>
    %63 = arith.addf %62, %61 : vector<32x64xf32>
    %64 = vector.broadcast %57 : vector<1x64xf32> to vector<32x64xf32>
    %65 = arith.addf %63, %64 : vector<32x64xf32>
    %66 = vector.broadcast %21 : f32 to vector<1x64xf32>
    %67 = arith.mulf %28, %66 : vector<1x64xf32>
    %68 = vector.broadcast %24 : f32 to vector<32x1xf32>
    %69 = arith.mulf %29, %68 : vector<32x1xf32>
    %70 = vector.broadcast %67 : vector<1x64xf32> to vector<32x64xf32>
    %71 = vector.broadcast %69 : vector<32x1xf32> to vector<32x64xf32>
    %72 = arith.addf %70, %71 : vector<32x64xf32>
    %73 = vector.broadcast %27 : f32 to vector<32x64xf32>
    %74 = arith.addf %72, %73 : vector<32x64xf32>
    %75 = tpu.reciprocal %74 {approx = true} : vector<32x64xf32> -> vector<32x64xf32>
    %76 = arith.mulf %74, %75 : vector<32x64xf32>
    %cst = arith.constant 2.000000e+00 : f32
    %77 = vector.broadcast %cst : f32 to vector<32x64xf32>
    %78 = arith.subf %77, %76 : vector<32x64xf32>
    %79 = arith.mulf %75, %78 : vector<32x64xf32>
    %80 = arith.mulf %74, %79 : vector<32x64xf32>
    %cst_10 = arith.constant 2.000000e+00 : f32
    %81 = vector.broadcast %cst_10 : f32 to vector<32x64xf32>
    %82 = arith.subf %81, %80 : vector<32x64xf32>
    %83 = arith.mulf %79, %82 : vector<32x64xf32>
    %84 = arith.mulf %65, %83 : vector<32x64xf32>
    %c0_11 = arith.constant 0 : index
    %c0_12 = arith.constant 0 : index
    %c0_13 = arith.constant 0 : index
    %85 = vector.load %arg5[%c0_11, %c0_12, %c0_13] : memref<1x32x64xf32, #tpu.memory_space<vmem>>, vector<1x32x64xf32>
    %86 = vector.shape_cast %85 : vector<1x32x64xf32> to vector<32x64xf32>
    %87 = vector.shape_cast %84 : vector<32x64xf32> to vector<1x32x64xf32>
    tpu.vector_store %arg5[%c0_11, %c0_12, %c0_13], %87 {strides = array<i32>} : memref<1x32x64xf32, #tpu.memory_space<vmem>>, vector<1x32x64xf32>,
    return
  }
  func.func @transform_0(%arg0: i32, %arg1: i32) -> i32 {
    %c0_i32 = arith.constant 0 : i32
    %c0_i32_0 = arith.constant 0 : i32
    return %c0_i32 : i32
  }
  func.func @transform_1(%arg0: i32, %arg1: i32) -> (i32, i32) {
    %c0_i32 = arith.constant 0 : i32
    %c0_i32_0 = arith.constant 0 : i32
    %c0_i32_1 = arith.constant 0 : i32
    return %c0_i32, %c0_i32_0 : i32, i32
  }
  func.func @transform_2(%arg0: i32, %arg1: i32) -> (i32, i32) {
    %c0_i32 = arith.constant 0 : i32
    %c0_i32_0 = arith.constant 0 : i32
    return %arg1, %c0_i32 : i32, i32
  }
  func.func @transform_3(%arg0: i32, %arg1: i32) -> (i32, i32, i32) {
    %c0_i32 = arith.constant 0 : i32
    %c0_i32_0 = arith.constant 0 : i32
    return %arg0, %arg1, %c0_i32 : i32, i32, i32
  }
}

</mosaic_0001>

<llo_original>
// kernel: tpu_custom_call.1
$region0: #{tpu_custom_call.1}
  #allocation0 [shape = 'u32[]', space=smem, size = 0x4, offset = 0x4, fixed_abs, tag = 'smem constant byte address 0x4 - core index']
  #allocation1 [shape = 'u32[72,128]{1,0:T(1,128)}', space=vmem, size = 0x9000, scoped, tag = 'internal scratch']
  %s0 = inlined_call_operand.vmem [shape: f32[18], index: 0, kind: input, shape index: {}]
  %s1 = inlined_call_operand.vmem [shape: f32[1,64], index: 1, kind: input, shape index: {}]
  %s2 = inlined_call_operand.vmem [shape: f32[32,1], index: 2, kind: input, shape index: {}]
  %s3 = inlined_call_operand.hbm [shape: f32[2,32,64], index: 3, kind: output, shape index: {}]
  %s4 = sld [smem:[#allocation0]]
  $region49: #{tpu_custom_call.1} parent=0
    _
  %s6 = ssub.s32 1, %s4
  %s7 = scalar_select 0, %s6, %s4
  $region1: #{tpu_custom_call.1} parent=0
    #allocation2 [shape = 'u8[512]{0}', space=smem, size = 0x200, scoped, tag = 'input window, operand 0, single buffered']
    #allocation3 [shape = 's32[2]{0}', space=sflag, size = 0x8, scoped, tag = 'scoped memory for tpu_custom_call.1']
    #allocation4 [shape = 's32[2]{0}', space=sflag, size = 0x8, scoped, tag = 'scoped memory for tpu_custom_call.1']
    #allocation5 [shape = 'u8[32768]{0}', space=vmem, size = 0x8000, scoped, tag = 'output window, operand 0']
    %8 = vsyncpa [#allocation4], 0
    %9 = vsyncpa [#allocation3], 0
    %s10 = scalar_lea.sflag [#allocation3], 1
    %11 = vsyncpa %s10, 0
    loop: start=0, step=1, limit=4
    $region2: #{tpu_custom_call.1} parent=1 // loop_pre_header
      _
    $region3: #{tpu_custom_call.1} parent=1 // loop_header
      %s13 = sphi 0, %s17
      %p14 = scmp.ge.s32.totalorder %s13, 4
      %s20 = sphi 0, %s32
      %s21 = sphi 0, %s28
      %s22 = sphi 0, %s20
      %s23 = sphi 0, %s21
      %s24 = sphi 0, %s22
      %s25 = sphi 0, %s23
      %s33 = sphi 0, %s33
      %s35 = sphi 0, %s33
      %s36 = sphi 0, %s35
      %s50 = sphi 0, %s36
      %s54 = sphi 0, %s54
      %s56 = sphi 0, %s54
      %s57 = sphi 0, %s56
      %s71 = sphi 0, %s57
      %s77 = sphi 0, %s79
      %s80 = sphi 0, %s77
      %s81 = sphi 0, %s80
      %s97 = sphi 0, %s81
      %s105 = sphi 0, %s107
      %s108 = sphi 0, %s105
      %s109 = sphi 0, %s108
      %s125 = sphi 0, %s109
    $region4: #{tpu_custom_call.1} parent=1 // loop_header_branch
      %16 = sbr.rel (%p14) target = $region8
    $region5: #{tpu_custom_call.1} parent=1 // loop_body
      %s18 = ssub.s32 %s13, 1
      %s19 = ssub.s32 %s13, 2
      %s26 = sadd.s32 1, %s21
      %p27 = scmp.ge.s32.totalorder %s26, 1
      %s28 = scalar_select %p27, 0, %s26
      %s29 = sadd.s32 1, %s20
      %s30 = scalar_select %p27, %s29, %s20
      %p31 = scmp.ge.s32.totalorder %s30, 2
      %s32 = scalar_select %p31, 0, %s30
      %s34 = sadd.s32 %s33, 1
      %p37 = scmp.eq.s32.totalorder %s13, 1
      %p38 = scmp.ne.s32.totalorder %s33, %s35
      %p39 = scmp.eq.s32.totalorder %s13, 0
      %p40 = por %p38, %p39
      %p41 = scmp.ne.s32.totalorder %s33, %s35
      %p42 = scmp.eq.s32.totalorder %s18, 1
      %p43 = por %p41, %p42
      %p44 = scmp.ne.s32.totalorder %s35, %s36
      %p45 = scmp.eq.s32.totalorder %s18, 0
      %p46 = por %p44, %p45
      %p47 = scmp.ne.s32.totalorder %s35, %s36
      %p48 = scmp.eq.s32.totalorder %s19, 1
      %p49 = por %p47, %p48
      %p51 = scmp.ne.s32.totalorder %s36, %s50
      %p52 = scmp.eq.s32.totalorder %s19, 0
      %p53 = por %p51, %p52
      %s55 = sadd.s32 %s54, 1
      %p58 = scmp.eq.s32.totalorder %s13, 1
      %p59 = scmp.ne.s32.totalorder %s54, %s56
      %p60 = scmp.eq.s32.totalorder %s13, 0
      %p61 = por %p59, %p60
      %p62 = scmp.ne.s32.totalorder %s54, %s56
      %p63 = scmp.eq.s32.totalorder %s18, 1
      %p64 = por %p62, %p63
      %p65 = scmp.ne.s32.totalorder %s56, %s57
      %p66 = scmp.eq.s32.totalorder %s18, 0
      %p67 = por %p65, %p66
      %p68 = scmp.ne.s32.totalorder %s56, %s57
      %p69 = scmp.eq.s32.totalorder %s19, 1
      %p70 = por %p68, %p69
      %p72 = scmp.ne.s32.totalorder %s57, %s71
      %p73 = scmp.eq.s32.totalorder %s19, 0
      %p74 = por %p72, %p73
      %s75 = ssub.s32 %s21, %s28
      %p76 = scmp.eq.s32.totalorder %s75, 0
      %s78 = sadd.s32 %s77, 1
      %s79 = scalar_select %p76, %s77, %s78
      %p82 = pneg %p76
      %p83 = scmp.eq.s32.totalorder %s13, 1
      %p84 = por %p82, %p83
      %p85 = scmp.ne.s32.totalorder %s77, %s80
      %p86 = scmp.eq.s32.totalorder %s13, 0
      %p87 = por %p85, %p86
      %p88 = scmp.ne.s32.totalorder %s77, %s80
      %p89 = scmp.eq.s32.totalorder %s18, 1
      %p90 = por %p88, %p89
      %p91 = scmp.ne.s32.totalorder %s80, %s81
      %p92 = scmp.eq.s32.totalorder %s18, 0
      %p93 = por %p91, %p92
      %p94 = scmp.ne.s32.totalorder %s80, %s81
      %p95 = scmp.eq.s32.totalorder %s19, 1
      %p96 = por %p94, %p95
      %p98 = scmp.ne.s32.totalorder %s81, %s97
      %p99 = scmp.eq.s32.totalorder %s19, 0
      %p100 = por %p98, %p99
      %s101 = ssub.s32 %s20, %s32
      %s102 = ssub.s32 %s21, %s28
      %s103 = sor.u32 %s101, %s102
      %p104 = scmp.eq.s32.totalorder %s103, 0
      %s106 = sadd.s32 %s105, 1
      %s107 = scalar_select %p104, %s105, %s106
      %p110 = pneg %p104
      %p111 = scmp.eq.s32.totalorder %s13, 1
      %p112 = por %p110, %p111
      %p113 = scmp.ne.s32.totalorder %s105, %s108
      %p114 = scmp.eq.s32.totalorder %s13, 0
      %p115 = por %p113, %p114
      %p116 = scmp.ne.s32.totalorder %s105, %s108
      %p117 = scmp.eq.s32.totalorder %s18, 1
      %p118 = por %p116, %p117
      %p119 = scmp.ne.s32.totalorder %s108, %s109
      %p120 = scmp.eq.s32.totalorder %s18, 0
      %p121 = por %p119, %p120
      %p122 = scmp.ne.s32.totalorder %s108, %s109
      %p123 = scmp.eq.s32.totalorder %s19, 1
      %p124 = por %p122, %p123
      %p126 = scmp.ne.s32.totalorder %s109, %s125
      %p127 = scmp.eq.s32.totalorder %s19, 0
      %p128 = por %p126, %p127
      %p129 = scmp.le.s32.totalorder 1, %s13
      %p130 = scmp.lt.s32.totalorder %s13, 3
      %p131 = pnand %p129, %p130
      %p132 = pneg %p131
      // Predicated region
      $region9: #{tpu_custom_call.1} parent=5 // pred_check
        _
      $region10: #{tpu_custom_call.1} parent=5 // pred_check_branch
        %134 = sbr.rel (%p131) target = $region12
      $region11: #{tpu_custom_call.1} parent=5 // pred_region
        %s135 = ssub.s32 %s13, 1
        // Predicated region
        $region13: #{tpu_custom_call.1} parent=11 // pred_check
          %p136 = pneg %p46
        $region14: #{tpu_custom_call.1} parent=11 // pred_check_branch
          %138 = sbr.rel (%p136) target = $region16
        $region15: #{tpu_custom_call.1} parent=11 // pred_region
          %140 = vsyncadd [#allocation4], 0
          %s142 = sshll.u32 %s0, 4
          %s143 = int_to_ptr.vmem [resolvable:$true] %s142
          %145 = dma.vmem_to_smem %s143, 16, [#allocation2], [#allocation4]
        $region16: #{tpu_custom_call.1} parent=11 // pred_fallthru
          _
        // Predicated region
        $region17: #{tpu_custom_call.1} parent=11 // pred_check
          %p146 = pneg %p67
        $region18: #{tpu_custom_call.1} parent=11 // pred_check_branch
          %148 = sbr.rel (%p146) target = $region20
        $region19: #{tpu_custom_call.1} parent=11 // pred_region
          _
        $region20: #{tpu_custom_call.1} parent=11 // pred_fallthru
          _
        // Predicated region
        $region21: #{tpu_custom_call.1} parent=11 // pred_check
          %p149 = pneg %p93
        $region22: #{tpu_custom_call.1} parent=11 // pred_check_branch
          %151 = sbr.rel (%p149) target = $region24
        $region23: #{tpu_custom_call.1} parent=11 // pred_region
          %s152 = smul.u32 4, %s23
          %p153 = scmp.lt.s32.totalorder %s152, 3
          %s154 = scalar_select %p153, %s152, 3
          %s155 = smul.addr %s154, 8
          %s156 = scalar_lea.vmem %s2, %s155
          %s157 = smul.u32 4, %s23
        $region24: #{tpu_custom_call.1} parent=11 // pred_fallthru
          _
      $region12: #{tpu_custom_call.1} parent=5 // pred_fallthru
        _
      %p158 = scmp.lt.s32.totalorder %s13, 2
      // Predicated region
      $region25: #{tpu_custom_call.1} parent=5 // pred_check
        %p159 = pneg %p158
      $region26: #{tpu_custom_call.1} parent=5 // pred_check_branch
        %161 = sbr.rel (%p159) target = $region28
      $region27: #{tpu_custom_call.1} parent=5 // pred_region
        _
      $region28: #{tpu_custom_call.1} parent=5 // pred_fallthru
        _
      %p162 = scmp.le.s32.totalorder 1, %s13
      %p163 = scmp.lt.s32.totalorder %s13, 3
      %p164 = pnand %p162, %p163
      %p165 = pneg %p164
      // Predicated region
      $region29: #{tpu_custom_call.1} parent=5 // pred_check
        _
      $region30: #{tpu_custom_call.1} parent=5 // pred_check_branch
        %167 = sbr.rel (%p164) target = $region32
      $region31: #{tpu_custom_call.1} parent=5 // pred_region
        %s168 = ssub.s32 %s13, 1
        // Predicated region
        $region33: #{tpu_custom_call.1} parent=31 // pred_check
          %p169 = pneg %p46
        $region34: #{tpu_custom_call.1} parent=31 // pred_check_branch
          %171 = sbr.rel (%p169) target = $region36
        $region35: #{tpu_custom_call.1} parent=31 // pred_region
          %173 = dma.done [#allocation4], 16
        $region36: #{tpu_custom_call.1} parent=31 // pred_fallthru
          _
        %174 = sfence
        %p175 = pneg %p46
        %p176 = pneg %p43
        %p177 = pneg %p67
        %p178 = pneg %p64
        %s179 = smul.u32 4, %s23
        %p180 = scmp.lt.s32.totalorder %s179, 3
        %s181 = scalar_select %p180, %s179, 3
        %s182 = smul.addr %s181, 8
        %s183 = scalar_lea.vmem %s2, %s182
        %p184 = pneg %p93
        %p185 = pneg %p90
        %p186 = pneg %p121
        %p187 = pneg %p118
        %s188 = sand.u32 %s108, 1
        %s189 = scalar_lea.sflag [#allocation3], %s188
        %s190 = sand.u32 %s108, 1
        %s191 = smul.addr %s190, 32
        %s192 = scalar_lea.vmem [#allocation5], %s191
        %s193 = smul.u32 4, %s23
        %p194 = scmp.lt.s32.totalorder %s193, 3
        %s195 = scalar_select %p194, %s193, 3
        %s196 = smul.addr %s195, 8
        %s197 = scalar_lea.vmem %s2, %s196
        %s198 = smul.u32 4, %s23
        %s199 = smul.u32 4, %s23
        %s200 = smul.u32 %s22, 9
        %s201 = sld [smem:[#allocation2 + %s200]]
        %s202 = sadd.s32 %s200, 1
        %s203 = sld [smem:[#allocation2 + %s202]]
        %s204 = sadd.s32 %s200, 2
        %s205 = sld [smem:[#allocation2 + %s204]]
        %s206 = sadd.s32 %s200, 3
        %s207 = sld [smem:[#allocation2 + %s206]]
        %s208 = sadd.s32 %s200, 4
        %s209 = sld [smem:[#allocation2 + %s208]]
        %s210 = sadd.s32 %s200, 5
        %s211 = sld [smem:[#allocation2 + %s210]]
        %s212 = sadd.s32 %s200, 6
        %s213 = sld [smem:[#allocation2 + %s212]]
        %s214 = sadd.s32 %s200, 7
        %s215 = sld [smem:[#allocation2 + %s214]]
        %s216 = sadd.s32 %s200, 8
        %s217 = sld [smem:[#allocation2 + %s216]]
        %v218 = vld [vmem:[%s1] sm:$0x1]
        %v219 = vld [vmem:[%s197] sm:$0xff]
        %v220 = vld [vmem:[%s197 + $0x8] sm:$0xff]
        %v221 = vld [vmem:[%s197 + $0x10] sm:$0xff]
        %v222 = vld [vmem:[%s197 + $0x18] sm:$0xff]
        %v223 = vlaneseq
        %v224 = vand.u32 %v223, 127
        %vm225 = vcmp.lt.s32.totalorder %v224, 0
        %v226 = vsub.s32 0, %v224
        %v227 = vsel %vm225, %v226, %v224
        %v228 = vshrl.u32 %v227, 1
        %v229 = vand.u32 %v227, 1
        %v230 = vsub.s32 0, %v229
        %v231 = vsel %vm225, %v230, %v229
        %vm232 = vcmp.ne.s32.totalorder %v231, 0
        %vm233 = vcmp.lt.s32.totalorder %v231, 0
        %vm234 = vmand %vm233, %vm232
        %v235 = vadd.s32 %v231, 2
        %v236 = vsel %vm234, %v235, %v231
        %vm237 = vcmp.eq.s32.totalorder %v236, 0
        %v238 = vstv %s201
        %v239 = vstv %s207
        %v240 = vsel %vm237, %v238, %v239
        %v241 = vstv %s203
        %v242 = vstv %s209
        %v243 = vsel %vm237, %v241, %v242
        %v244 = vstv %s205
        %v245 = vstv %s211
        %v246 = vsel %vm237, %v244, %v245
        %v247 = vmul.f32 %v218, %v240
        %249 = vset.pattern.permute.xlu0 0
        %250 = vperm.xlu0 %249, %v219
        %v251 = vpop.permute.xlu0 %250
        %254 = vset.pattern.permute.xlu0 0
        %255 = vperm.xlu0 %254, %v220
        %v256 = vpop.permute.xlu0 %255
        %259 = vset.pattern.permute.xlu0 0
        %260 = vperm.xlu0 %259, %v221
        %v261 = vpop.permute.xlu0 %260
        %264 = vset.pattern.permute.xlu0 0
        %265 = vperm.xlu0 %264, %v222
        %v266 = vpop.permute.xlu0 %265
        %v268 = vmul.f32 %v251, %v243
        %v269 = vmul.f32 %v256, %v243
        %v270 = vmul.f32 %v261, %v243
        %v271 = vmul.f32 %v266, %v243
        %v273 = vperm.slane %v247, 0
        %v275 = vadd.f32 %v273, %v268
        %v276 = vadd.f32 %v273, %v269
        %v277 = vadd.f32 %v273, %v270
        %v278 = vadd.f32 %v273, %v271
        %v279 = vadd.f32 %v275, %v246
        %v280 = vadd.f32 %v276, %v246
        %v281 = vadd.f32 %v277, %v246
        %v282 = vadd.f32 %v278, %v246
        %v283 = vstv %s213
        %v284 = vmul.f32 %v218, %v283
        %v285 = vstv %s215
        %v286 = vmul.f32 %v219, %v285
        %v287 = vmul.f32 %v220, %v285
        %v288 = vmul.f32 %v221, %v285
        %v289 = vmul.f32 %v222, %v285
        %v291 = vperm.slane %v284, 0
        %294 = vset.pattern.permute.xlu0 0
        %295 = vperm.xlu0 %294, %v286
        %v296 = vpop.permute.xlu0 %295
        %299 = vset.pattern.permute.xlu0 0
        %300 = vperm.xlu0 %299, %v287
        %v301 = vpop.permute.xlu0 %300
        %304 = vset.pattern.permute.xlu0 0
        %305 = vperm.xlu0 %304, %v288
        %v306 = vpop.permute.xlu0 %305
        %309 = vset.pattern.permute.xlu0 0
        %310 = vperm.xlu0 %309, %v289
        %v311 = vpop.permute.xlu0 %310
        %v313 = vadd.f32 %v291, %v296
        %v314 = vadd.f32 %v291, %v301
        %v315 = vadd.f32 %v291, %v306
        %v316 = vadd.f32 %v291, %v311
        %v317 = vstv %s217
        %v318 = vadd.f32 %v313, %v317
        %v319 = vadd.f32 %v314, %v317
        %v320 = vadd.f32 %v315, %v317
        %v321 = vadd.f32 %v316, %v317
        %v322 = vrcp.pop %v318
        %v323 = vrcp.pop %v319
        %v324 = vrcp.pop %v320
        %v325 = vrcp.pop %v321
        %v326 = vmul.f32 %v318, %v322
        %v327 = vmul.f32 %v319, %v323
        %v328 = vmul.f32 %v320, %v324
        %v329 = vmul.f32 %v321, %v325
        %v330 = vsub.f32 2.0, %v326
        %v331 = vsub.f32 2.0, %v327
        %v332 = vsub.f32 2.0, %v328
        %v333 = vsub.f32 2.0, %v329
        %v334 = vmul.f32 %v322, %v330
        %v335 = vmul.f32 %v323, %v331
        %v336 = vmul.f32 %v324, %v332
        %v337 = vmul.f32 %v325, %v333
        %v338 = vmul.f32 %v318, %v334
        %v339 = vmul.f32 %v319, %v335
        %v340 = vmul.f32 %v320, %v336
        %v341 = vmul.f32 %v321, %v337
        %v342 = vsub.f32 2.0, %v338
        %v343 = vsub.f32 2.0, %v339
        %v344 = vsub.f32 2.0, %v340
        %v345 = vsub.f32 2.0, %v341
        %v346 = vmul.f32 %v334, %v342
        %v347 = vmul.f32 %v335, %v343
        %v348 = vmul.f32 %v336, %v344
        %v349 = vmul.f32 %v337, %v345
        %v350 = vmul.f32 %v279, %v346
        %v351 = vmul.f32 %v280, %v347
        %v352 = vmul.f32 %v281, %v348
        %v353 = vmul.f32 %v282, %v349
        %vm354 = vcmask 523264
        %355 = vst.msk [vmem:[%s192] sm:$0xff] %vm354, %v350
        %356 = vst.msk [vmem:[%s192 + $0x8] sm:$0xff] %vm354, %v351
        %357 = vst.msk [vmem:[%s192 + $0x10] sm:$0xff] %vm354, %v352
        %358 = vst.msk [vmem:[%s192 + $0x18] sm:$0xff] %vm354, %v353
        %s359 = sand.u32 %s108, 1
        %s360 = scalar_lea.sflag [#allocation3], %s359
        %s361 = sand.u32 %s108, 1
        %s362 = smul.addr %s361, 32
        %s363 = scalar_lea.vmem [#allocation5], %s362
        // Predicated region
        $region37: #{tpu_custom_call.1} parent=31 // pred_check
          %p364 = pneg %p118
        $region38: #{tpu_custom_call.1} parent=31 // pred_check_branch
          %366 = sbr.rel (%p364) target = $region40
        $region39: #{tpu_custom_call.1} parent=31 // pred_region
          %s367 = smul.u32 4, %s23
          %369 = vsyncadd %s360, 0
          %s370 = smul.addr %s22, 4
          %s371 = sadd.s32 %s367, %s370
          %s372 = smul.addr %s371, 8
          %s373 = scalar_lea.hbm %s3, %s372
          %s374 = sshll.u32 %s363, 4
          %s375 = int_to_ptr.vmem [resolvable:$true] %s374
          %s376 = sshll.u32 %s373, 4
          %s377 = int_to_ptr.hbm [resolvable:$true] %s376
          %382 = dma.vmem_to_hbm [thread:$0]  %s375, 512, %s377, %s360, 128, 128, 8
        $region40: #{tpu_custom_call.1} parent=31 // pred_fallthru
          _
      $region32: #{tpu_custom_call.1} parent=5 // pred_fallthru
        _
      %p383 = scmp.le.s32.totalorder 2, %s13
      // Predicated region
      $region41: #{tpu_custom_call.1} parent=5 // pred_check
        %p384 = pneg %p383
      $region42: #{tpu_custom_call.1} parent=5 // pred_check_branch
        %386 = sbr.rel (%p384) target = $region44
      $region43: #{tpu_custom_call.1} parent=5 // pred_region
        %s387 = ssub.s32 %s13, 2
        // Predicated region
        $region45: #{tpu_custom_call.1} parent=43 // pred_check
          %p388 = pneg %p124
        $region46: #{tpu_custom_call.1} parent=43 // pred_check_branch
          %390 = sbr.rel (%p388) target = $region48
        $region47: #{tpu_custom_call.1} parent=43 // pred_region
          %s391 = sand.u32 %s109, 1
          %s392 = scalar_lea.sflag [#allocation3], %s391
          %s393 = sand.u32 %s109, 1
          %s394 = smul.addr %s393, 32
          %s395 = scalar_lea.vmem [#allocation5], %s394
          %397 = dma.done %s392, 512
        $region48: #{tpu_custom_call.1} parent=43 // pred_fallthru
          _
      $region44: #{tpu_custom_call.1} parent=5 // pred_fallthru
        _
    $region6: #{tpu_custom_call.1} parent=1 // loop_footer
      %s17 = sadd.s32 1, %s13
    $region7: #{tpu_custom_call.1} parent=1 // loop_footer_branch
      %12 = sbr.rel target = $region3
    $region8: #{tpu_custom_call.1} parent=1 // loop_exit
      _
    %398 = vsyncpa [#allocation3], 1
    %s399 = scalar_lea.sflag [#allocation3], 1
    %400 = vsyncpa %s399, 1
    %401 = vsyncpa [#allocation4], 1
    %s402 = scalar_lea.sflag [#allocation4], 1
    %403 = vsyncpa %s402, 1

</llo_original>
